<compile_context>
chip_gen: v5e
topology: v5e:2x2
jax: 0.10.0
libtpu: 0.0.40
codegen_flags: <defaults>
</compile_context>

<pallas_src>
import functools

import numpy as np

import jax
import jax.numpy as jnp
from jax import lax
from jax.experimental import pallas as pl
from jax.experimental.pallas import tpu as pltpu


def _round_up(v, m):
    return (v + m - 1) // m * m


def _vreg_padded_bytes(shape, dtype):
    """VMEM bytes for a block after Mosaic pads to (sublane, 128) vreg tiles."""
    itemsize = np.dtype(dtype).itemsize
    sublane = 8 * max(1, 4 // itemsize)           # 8 rows f32, 16 rows bf16
    dims = list(shape) if len(shape) >= 2 else [1, *shape]
    lead = 1
    for d in dims[:-2]:
        lead *= int(d)
    rows = _round_up(int(dims[-2]), sublane)
    cols = _round_up(int(dims[-1]), 128)
    return lead * rows * cols * itemsize


def _pick_m_tile(m_total, k_dim, c_out_p):
    """Largest row tile that still yields >= 8 grid steps (>= 4 per v7x core)
    and fits comfortably in v7x's 64 MiB VMEM when double-buffered."""
    def step_bytes(t):
        return (2 * _vreg_padded_bytes((t, k_dim), jnp.bfloat16)      # x blocks
                + 2 * _vreg_padded_bytes((t, c_out_p), jnp.float32)   # out blocks
                + _vreg_padded_bytes((t, c_out_p), jnp.float32)       # f32 acc
                + _vreg_padded_bytes((k_dim, c_out_p), jnp.bfloat16)) # weights (x1)

    tile = None
    for cand in (512, 256, 128, 64):
        if (m_total + cand - 1) // cand >= 8:
            tile = cand
            break
    if tile is None:  # tiny problem: one or few steps, just cover it
        tile = min(512, _round_up(max(m_total, 8), 8))
    budget = 40 * 1024 * 1024   # headroom under v7x's 64 MiB physical VMEM
    while tile > 8 and step_bytes(tile) > budget:
        tile //= 2
    return tile


def _conv_bn_relu_kernel(x_ref, w_ref, shift_ref, o_ref):
    # x_ref:     (m_tile, K)       bf16 im2col patch rows (K = KH*KW*C_in)
    # w_ref:     (K, c_out_p)      bf16 BN-scale-folded conv weight
    # shift_ref: (1, c_out_p)      f32 fused bias*scale + beta - mean*scale
    # o_ref:     (m_tile, c_out_p) f32 output rows
    acc = jnp.dot(x_ref[...], w_ref[...], preferred_element_type=jnp.float32)
    acc = acc + shift_ref[...]                    # broadcast over rows
    o_ref[...] = jnp.maximum(acc, 0.0).astype(o_ref.dtype)


@functools.partial(jax.jit, static_argnames=("kernel_size", "padding"))
def conv_block_forward(x, weight, bias, gamma, beta, running_mean, running_var,
                       *, kernel_size, padding, eps=1e-5):
    """x: [N, C_in, H, W] float32 (NCHW, like PyTorch). Returns [N, C_out, OH, OW]."""
    n, c_in, h, w = x.shape
    c_out, c_in_w, kh, kw = weight.shape
    assert c_in_w == c_in and kh == kernel_size and kw == kernel_size

    oh = h + 2 * padding - kh + 1
    ow = w + 2 * padding - kw + 1
    k_dim = kh * kw * c_in
    m_total = n * oh * ow

    compute_dtype = jnp.bfloat16  # MXU operand dtype; accumulation stays f32

    # ---- Fold inference-mode BN + conv bias into weight columns + one shift.
    scale = gamma / jnp.sqrt(running_var + eps)                       # [C_out]
    fused_shift = (bias * scale + beta - running_mean * scale).astype(jnp.float32)
    w_folded = weight.astype(jnp.float32) * scale[:, None, None, None]
    # [C_out, C_in, KH, KW] -> [KH, KW, C_in, C_out] -> [K, C_out]
    w_mat = jnp.transpose(w_folded, (2, 3, 1, 0)).reshape(k_dim, c_out)

    # Only lane-pad the channel dim when it is large enough to be worth the
    # extra output HBM bytes (masked stores beat 16x inflation at c_out=8).
    c_out_p = _round_up(c_out, 128) if c_out >= 64 else c_out
    if c_out_p != c_out:
        w_mat = jnp.pad(w_mat, ((0, 0), (0, c_out_p - c_out)))
        fused_shift = jnp.pad(fused_shift, (0, c_out_p - c_out))
    w_mat = w_mat.astype(compute_dtype)
    shift_row = fused_shift.reshape(1, c_out_p)

    # ---- im2col patches: [N, OH, OW, KH*KW*C_in] -> [M, K]  (K order: kh, kw, c_in)
    x_nhwc = jnp.transpose(x, (0, 2, 3, 1)).astype(jnp.float32)
    x_pad = jnp.pad(x_nhwc, ((0, 0), (padding, padding), (padding, padding), (0, 0)))
    taps = [x_pad[:, i:i + oh, j:j + ow, :] for i in range(kh) for j in range(kw)]
    patches = jnp.concatenate(taps, axis=-1).reshape(m_total, k_dim)
    patches = patches.astype(compute_dtype)

    # ---- Tile M (batch folded in); pad rows so the grid divides evenly.
    m_tile = _pick_m_tile(m_total, k_dim, c_out_p)
    m_pad = _round_up(m_total, m_tile)
    if m_pad != m_total:
        patches = jnp.pad(patches, ((0, m_pad - m_total), (0, 0)))
    grid = (m_pad // m_tile,)

    # ---- VMEM budget from hardware-padded block sizes (not logical shapes).
    vmem_bytes = (2 * _vreg_padded_bytes((m_tile, k_dim), compute_dtype)
                  + _vreg_padded_bytes((k_dim, c_out_p), compute_dtype)
                  + _vreg_padded_bytes((1, c_out_p), jnp.float32)
                  + 2 * _vreg_padded_bytes((m_tile, c_out_p), jnp.float32)
                  + _vreg_padded_bytes((m_tile, c_out_p), jnp.float32))
    vmem_limit = int(min(64 * 1024 * 1024, max(32 * 1024 * 1024, 2 * vmem_bytes)))

    cost = pl.CostEstimate(
        flops=2 * m_total * k_dim * c_out,
        transcendentals=0,
        bytes_accessed=int(patches.size * np.dtype(compute_dtype).itemsize
                           + w_mat.size * np.dtype(compute_dtype).itemsize
                           + shift_row.size * 4
                           + m_total * c_out * 4))

    out_flat = pl.pallas_call(
        _conv_bn_relu_kernel,
        out_shape=jax.ShapeDtypeStruct((m_pad, c_out_p), jnp.float32),
        grid_spec=pltpu.PrefetchScalarGridSpec(
            num_scalar_prefetch=0,
            grid=grid,
            in_specs=[
                pl.BlockSpec((m_tile, k_dim), lambda i: (i, 0)),
                pl.BlockSpec((k_dim, c_out_p), lambda i: (0, 0),
                             pipeline_mode=pl.Buffered(1)),
                pl.BlockSpec((1, c_out_p), lambda i: (0, 0),
                             pipeline_mode=pl.Buffered(1)),
            ],
            out_specs=pl.BlockSpec((m_tile, c_out_p), lambda i: (i, 0)),
        ),
        compiler_params=pltpu.CompilerParams(
            dimension_semantics=("parallel",),
            vmem_limit_bytes=vmem_limit),
        cost_estimate=cost,
    )(patches, w_mat, shift_row)

    # Drop padded rows / channels, restore NCHW.
    out = out_flat[:m_total, :c_out].reshape(n, oh, ow, c_out)
    return jnp.transpose(out, (0, 3, 1, 2))


def _reference(x, weight, bias, gamma, beta, running_mean, running_var,
               kernel_size, padding, eps=1e-5, compute_dtype=jnp.bfloat16):
    """Conv+BN(inference)+ReLU reference with the SAME bf16 operand rounding as
    the kernel (so only f32 accumulation order differs)."""
    scale = gamma / jnp.sqrt(running_var + eps)
    shift = bias * scale + beta - running_mean * scale
    w_q = (weight * scale[:, None, None, None]).astype(compute_dtype).astype(jnp.float32)
    x_q = x.astype(compute_dtype).astype(jnp.float32)
    y = lax.conv_general_dilated(
        x_q, w_q, window_strides=(1, 1),
        padding=[(padding, padding), (padding, padding)],
        dimension_numbers=("NCHW", "OIHW", "NCHW"),
        precision=lax.Precision.HIGHEST)
    return jnp.maximum(y + shift.reshape(1, -1, 1, 1), 0.0)


if __name__ == "__main__":
    # Small deterministic setup consistent with ConvBlock(in=4, out=8, k=3, pad=1).
    batch, c_in, c_out, hw, ksize, pad = 2, 4, 8, 16, 3, 1

    key = jax.random.PRNGKey(0)
    kx, kw_, kb, kg, kbe, km, kv = jax.random.split(key, 7)

    x = jax.random.normal(kx, (batch, c_in, hw, hw), dtype=jnp.float32)
    weight = jax.random.normal(kw_, (c_out, c_in, ksize, ksize), dtype=jnp.float32) * 0.1
    bias = jax.random.normal(kb, (c_out,), dtype=jnp.float32) * 0.1
    gamma = 1.0 + 0.1 * jax.random.normal(kg, (c_out,), dtype=jnp.float32)
    beta = 0.1 * jax.random.normal(kbe, (c_out,), dtype=jnp.float32)
    running_mean = 0.1 * jax.random.normal(km, (c_out,), dtype=jnp.float32)
    running_var = 1.0 + 0.1 * jax.random.uniform(kv, (c_out,), dtype=jnp.float32)

    out = conv_block_forward(x, weight, bias, gamma, beta, running_mean,
                             running_var, kernel_size=ksize, padding=pad)
    out = jax.block_until_ready(out)

    ref = _reference(x, weight, bias, gamma, beta, running_mean, running_var,
                     ksize, pad)
    assert out.shape == (batch, c_out, hw, hw)
    err = float(jnp.max(jnp.abs(out - ref)))
    assert jnp.allclose(out, ref, atol=2e-3, rtol=2e-3), f"max abs err {err}"

    print("KERNEL_OK")
</pallas_src>

<mosaic_0001>
module attributes {stable_mosaic.version = 11 : i64} {
  func.func @_conv_bn_relu_kernel(%arg0: i32, %arg1: memref<64x36xbf16, #tpu.memory_space<vmem>>, %arg2: memref<36x8xbf16, #tpu.memory_space<vmem>>, %arg3: memref<1x8xf32, #tpu.memory_space<vmem>>, %arg4: memref<64x8xf32, #tpu.memory_space<vmem>>) attributes {dimension_semantics = [#tpu.dimension_semantics<parallel>], iteration_bounds = array<i64: 8>, scalar_prefetch = 0 : i64, scratch_operands = 0 : i64, tpu.core_type = #tpu.core_type<tc>, window_params = [{transform_indices = @transform_0, window_bounds = array<i64: 64, 36>}, {pipeline_mode = #tpu.pipeline_mode<synchronous>, transform_indices = @transform_1, window_bounds = array<i64: 36, 8>}, {pipeline_mode = #tpu.pipeline_mode<synchronous>, transform_indices = @transform_2, window_bounds = array<i64: 1, 8>}, {transform_indices = @transform_3, window_bounds = array<i64: 64, 8>}]} {
    %c0 = arith.constant 0 : index
    %c0_0 = arith.constant 0 : index
    %0 = vector.load %arg1[%c0, %c0_0] : memref<64x36xbf16, #tpu.memory_space<vmem>>, vector<64x36xbf16>
    %c0_1 = arith.constant 0 : index
    %c0_2 = arith.constant 0 : index
    %1 = vector.load %arg2[%c0_1, %c0_2] : memref<36x8xbf16, #tpu.memory_space<vmem>>, vector<36x8xbf16>
    %cst = arith.constant dense<0.000000e+00> : vector<64x8xf32>
    %2 = tpu.matmul %0, %1, %cst {dimension_numbers = #tpu.dot_dimension_numbers<[1], [0], [0], [1], [0, 0, 1, 1], [], []>} : vector<64x36xbf16>, vector<36x8xbf16>, vector<64x8xf32> -> vector<64x8xf32>
    %c0_3 = arith.constant 0 : index
    %c0_4 = arith.constant 0 : index
    %3 = vector.load %arg3[%c0_3, %c0_4] : memref<1x8xf32, #tpu.memory_space<vmem>>, vector<1x8xf32>
    %4 = vector.broadcast %3 : vector<1x8xf32> to vector<64x8xf32>
    %5 = arith.addf %2, %4 : vector<64x8xf32>
    %cst_5 = arith.constant 0.000000e+00 : f32
    %6 = vector.broadcast %cst_5 : f32 to vector<64x8xf32>
    %7 = arith.maximumf %5, %6 : vector<64x8xf32>
    %c0_6 = arith.constant 0 : index
    %c0_7 = arith.constant 0 : index
    %8 = vector.load %arg4[%c0_6, %c0_7] : memref<64x8xf32, #tpu.memory_space<vmem>>, vector<64x8xf32>
    tpu.vector_store %arg4[%c0_6, %c0_7], %7 {strides = array<i32>} : memref<64x8xf32, #tpu.memory_space<vmem>>, vector<64x8xf32>,
    return
  }
  func.func @transform_0(%arg0: i32) -> (i32, i32) {
    %c0_i32 = arith.constant 0 : i32
    %c0_i32_0 = arith.constant 0 : i32
    return %arg0, %c0_i32 : i32, i32
  }
  func.func @transform_1(%arg0: i32) -> (i32, i32) {
    %c0_i32 = arith.constant 0 : i32
    %c0_i32_0 = arith.constant 0 : i32
    %c0_i32_1 = arith.constant 0 : i32
    return %c0_i32, %c0_i32_0 : i32, i32
  }
  func.func @transform_2(%arg0: i32) -> (i32, i32) {
    %c0_i32 = arith.constant 0 : i32
    %c0_i32_0 = arith.constant 0 : i32
    %c0_i32_1 = arith.constant 0 : i32
    return %c0_i32, %c0_i32_0 : i32, i32
  }
  func.func @transform_3(%arg0: i32) -> (i32, i32) {
    %c0_i32 = arith.constant 0 : i32
    %c0_i32_0 = arith.constant 0 : i32
    return %arg0, %c0_i32 : i32, i32
  }
}

</mosaic_0001>

<llo_original>
// kernel: conv_block_forward.1
$region0: #{conv_block_forward.1}
  #allocation0 [shape = 'u32[]', space=smem, size = 0x4, offset = 0x4, fixed_abs, tag = 'smem constant byte address 0x4 - core index']
  #allocation1 [shape = 'u32[72,128]{1,0:T(1,128)}', space=vmem, size = 0x9000, scoped, tag = 'internal scratch']
  %s0 = inlined_call_operand.vmem [shape: bf16[512,36], index: 0, kind: input, shape index: {}]
  %s1 = inlined_call_operand.vmem [shape: bf16[36,8], index: 1, kind: input, shape index: {}]
  %s2 = inlined_call_operand.vmem [shape: f32[1,8], index: 2, kind: input, shape index: {}]
  %s3 = inlined_call_operand.vmem [shape: f32[512,8], index: 3, kind: output, shape index: {}]
  %s4 = sld [smem:[#allocation0]]
  $region45: #{conv_block_forward.1} parent=0
    _
  %s6 = ssub.s32 1, %s4
  %s7 = scalar_select 0, %s6, %s4
  loop: start=0, step=1, limit=10
  $region2: #{conv_block_forward.1} parent=0 // loop_pre_header
    _
  $region3: #{conv_block_forward.1} parent=0 // loop_header
    %s9 = sphi 0, %s13
    %p10 = scmp.ge.s32.totalorder %s9, 10
    %s19 = sphi 0, %s21
    %s22 = sphi 0, %s19
    %s23 = sphi 0, %s22
    %s39 = sphi 0, %s23
    %s43 = sphi 0, %s43
    %s45 = sphi 0, %s43
    %s46 = sphi 0, %s45
    %s60 = sphi 0, %s46
    %s64 = sphi 0, %s64
    %s66 = sphi 0, %s64
    %s67 = sphi 0, %s66
    %s81 = sphi 0, %s67
    %s87 = sphi 0, %s89
    %s90 = sphi 0, %s87
    %s91 = sphi 0, %s90
    %s107 = sphi 0, %s91
  $region4: #{conv_block_forward.1} parent=0 // loop_header_branch
    %12 = sbr.rel (%p10) target = $region8
  $region5: #{conv_block_forward.1} parent=0 // loop_body
    %s14 = ssub.s32 %s9, 1
    %s15 = ssub.s32 %s9, 2
    %s16 = sadd.s32 %s9, 1
    %s17 = ssub.s32 %s9, %s16
    %p18 = scmp.eq.s32.totalorder %s17, 0
    %s20 = sadd.s32 %s19, 1
    %s21 = scalar_select %p18, %s19, %s20
    %p24 = pneg %p18
    %p25 = scmp.eq.s32.totalorder %s9, 7
    %p26 = por %p24, %p25
    %p27 = scmp.ne.s32.totalorder %s19, %s22
    %p28 = scmp.eq.s32.totalorder %s9, 0
    %p29 = por %p27, %p28
    %p30 = scmp.ne.s32.totalorder %s19, %s22
    %p31 = scmp.eq.s32.totalorder %s14, 7
    %p32 = por %p30, %p31
    %p33 = scmp.ne.s32.totalorder %s22, %s23
    %p34 = scmp.eq.s32.totalorder %s14, 0
    %p35 = por %p33, %p34
    %p36 = scmp.ne.s32.totalorder %s22, %s23
    %p37 = scmp.eq.s32.totalorder %s15, 7
    %p38 = por %p36, %p37
    %p40 = scmp.ne.s32.totalorder %s23, %s39
    %p41 = scmp.eq.s32.totalorder %s15, 0
    %p42 = por %p40, %p41
    %s44 = sadd.s32 %s43, 1
    %p47 = scmp.eq.s32.totalorder %s9, 7
    %p48 = scmp.ne.s32.totalorder %s43, %s45
    %p49 = scmp.eq.s32.totalorder %s9, 0
    %p50 = por %p48, %p49
    %p51 = scmp.ne.s32.totalorder %s43, %s45
    %p52 = scmp.eq.s32.totalorder %s14, 7
    %p53 = por %p51, %p52
    %p54 = scmp.ne.s32.totalorder %s45, %s46
    %p55 = scmp.eq.s32.totalorder %s14, 0
    %p56 = por %p54, %p55
    %p57 = scmp.ne.s32.totalorder %s45, %s46
    %p58 = scmp.eq.s32.totalorder %s15, 7
    %p59 = por %p57, %p58
    %p61 = scmp.ne.s32.totalorder %s46, %s60
    %p62 = scmp.eq.s32.totalorder %s15, 0
    %p63 = por %p61, %p62
    %s65 = sadd.s32 %s64, 1
    %p68 = scmp.eq.s32.totalorder %s9, 7
    %p69 = scmp.ne.s32.totalorder %s64, %s66
    %p70 = scmp.eq.s32.totalorder %s9, 0
    %p71 = por %p69, %p70
    %p72 = scmp.ne.s32.totalorder %s64, %s66
    %p73 = scmp.eq.s32.totalorder %s14, 7
    %p74 = por %p72, %p73
    %p75 = scmp.ne.s32.totalorder %s66, %s67
    %p76 = scmp.eq.s32.totalorder %s14, 0
    %p77 = por %p75, %p76
    %p78 = scmp.ne.s32.totalorder %s66, %s67
    %p79 = scmp.eq.s32.totalorder %s15, 7
    %p80 = por %p78, %p79
    %p82 = scmp.ne.s32.totalorder %s67, %s81
    %p83 = scmp.eq.s32.totalorder %s15, 0
    %p84 = por %p82, %p83
    %s85 = ssub.s32 %s9, %s16
    %p86 = scmp.eq.s32.totalorder %s85, 0
    %s88 = sadd.s32 %s87, 1
    %s89 = scalar_select %p86, %s87, %s88
    %p92 = pneg %p86
    %p93 = scmp.eq.s32.totalorder %s9, 7
    %p94 = por %p92, %p93
    %p95 = scmp.ne.s32.totalorder %s87, %s90
    %p96 = scmp.eq.s32.totalorder %s9, 0
    %p97 = por %p95, %p96
    %p98 = scmp.ne.s32.totalorder %s87, %s90
    %p99 = scmp.eq.s32.totalorder %s14, 7
    %p100 = por %p98, %p99
    %p101 = scmp.ne.s32.totalorder %s90, %s91
    %p102 = scmp.eq.s32.totalorder %s14, 0
    %p103 = por %p101, %p102
    %p104 = scmp.ne.s32.totalorder %s90, %s91
    %p105 = scmp.eq.s32.totalorder %s15, 7
    %p106 = por %p104, %p105
    %p108 = scmp.ne.s32.totalorder %s91, %s107
    %p109 = scmp.eq.s32.totalorder %s15, 0
    %p110 = por %p108, %p109
    %p111 = scmp.le.s32.totalorder 1, %s9
    %p112 = scmp.lt.s32.totalorder %s9, 9
    %p113 = pnand %p111, %p112
    %p114 = pneg %p113
    // Predicated region
    $region9: #{conv_block_forward.1} parent=5 // pred_check
      _
    $region10: #{conv_block_forward.1} parent=5 // pred_check_branch
      %116 = sbr.rel (%p113) target = $region12
    $region11: #{conv_block_forward.1} parent=5 // pred_region
      %s117 = ssub.s32 %s9, 1
      // Predicated region
      $region13: #{conv_block_forward.1} parent=11 // pred_check
        %p118 = pneg %p56
      $region14: #{conv_block_forward.1} parent=11 // pred_check_branch
        %120 = sbr.rel (%p118) target = $region16
      $region15: #{conv_block_forward.1} parent=11 // pred_region
        _
      $region16: #{conv_block_forward.1} parent=11 // pred_fallthru
        _
      // Predicated region
      $region17: #{conv_block_forward.1} parent=11 // pred_check
        %p121 = pneg %p77
      $region18: #{conv_block_forward.1} parent=11 // pred_check_branch
        %123 = sbr.rel (%p121) target = $region20
      $region19: #{conv_block_forward.1} parent=11 // pred_region
        _
      $region20: #{conv_block_forward.1} parent=11 // pred_fallthru
        _
    $region12: #{conv_block_forward.1} parent=5 // pred_fallthru
      _
    %p124 = scmp.lt.s32.totalorder %s9, 8
    // Predicated region
    $region21: #{conv_block_forward.1} parent=5 // pred_check
      %p125 = pneg %p124
    $region22: #{conv_block_forward.1} parent=5 // pred_check_branch
      %127 = sbr.rel (%p125) target = $region24
    $region23: #{conv_block_forward.1} parent=5 // pred_region
      // Predicated region
      $region25: #{conv_block_forward.1} parent=23 // pred_check
        %p128 = pneg %p29
      $region26: #{conv_block_forward.1} parent=23 // pred_check_branch
        %130 = sbr.rel (%p128) target = $region28
      $region27: #{conv_block_forward.1} parent=23 // pred_region
        %s131 = smul.u32 8, %s9
        %p132 = scmp.lt.s32.totalorder %s131, 63
        %s133 = scalar_select %p132, %s131, 63
        %s134 = smul.addr %s133, 4
        %s135 = scalar_lea.vmem %s0, %s134
        %s136 = smul.u32 8, %s9
      $region28: #{conv_block_forward.1} parent=23 // pred_fallthru
        _
    $region24: #{conv_block_forward.1} parent=5 // pred_fallthru
      _
    %p137 = scmp.le.s32.totalorder 1, %s9
    %p138 = scmp.lt.s32.totalorder %s9, 9
    %p139 = pnand %p137, %p138
    %p140 = pneg %p139
    // Predicated region
    $region29: #{conv_block_forward.1} parent=5 // pred_check
      _
    $region30: #{conv_block_forward.1} parent=5 // pred_check_branch
      %142 = sbr.rel (%p139) target = $region32
    $region31: #{conv_block_forward.1} parent=5 // pred_region
      %s143 = ssub.s32 %s9, 1
      %s144 = smul.u32 8, %s14
      %p145 = scmp.lt.s32.totalorder %s144, 63
      %s146 = scalar_select %p145, %s144, 63
      %s147 = smul.addr %s146, 4
      %s148 = scalar_lea.vmem %s0, %s147
      %p149 = pneg %p35
      %p150 = pneg %p32
      %p151 = pneg %p56
      %p152 = pneg %p53
      %p153 = pneg %p77
      %p154 = pneg %p74
      %p155 = pneg %p103
      %p156 = pneg %p100
      %s157 = smul.u32 8, %s14
      %p158 = scmp.lt.s32.totalorder %s157, 63
      %s159 = scalar_select %p158, %s157, 63
      %s160 = smul.addr %s159, 8
      %s161 = scalar_lea.vmem %s3, %s160
      %s162 = smul.u32 8, %s14
      %p163 = scmp.lt.s32.totalorder %s162, 63
      %s164 = scalar_select %p163, %s162, 63
      %s165 = smul.addr %s164, 4
      %s166 = scalar_lea.vmem %s0, %s165
      %s167 = smul.u32 8, %s14
      %s168 = smul.u32 8, %s14
      %p169 = scmp.lt.s32.totalorder %s168, 63
      %s170 = scalar_select %p169, %s168, 63
      %s171 = smul.addr %s170, 8
      %s172 = scalar_lea.vmem %s3, %s171
      %s173 = smul.u32 8, %s14
      %v175 = vld [vmem:[%s166] sm:$0xf]
      %v176 = vld [vmem:[%s166 + $0x4] sm:$0xf]
      %v177 = vld [vmem:[%s166 + $0x8] sm:$0xf]
      %v178 = vld [vmem:[%s166 + $0xc] sm:$0xf]
      %v179 = vld [vmem:[%s166 + $0x10] sm:$0xf]
      %v180 = vld [vmem:[%s166 + $0x14] sm:$0xf]
      %v181 = vld [vmem:[%s166 + $0x18] sm:$0xf]
      %v182 = vld [vmem:[%s166 + $0x1c] sm:$0xf]
      %v183 = vld [vmem:[%s1] sm:$0xf]
      %v184 = vld [vmem:[%s1 + $0x4] sm:$0xf]
      %v185 = vld [vmem:[%s1 + $0x8] sm:$0xf]
      %v186 = vld [vmem:[%s1 + $0xc] sm:$0xf]
      %v187 = vld [vmem:[%s1 + $0x10] sm:$0x3]
      %v188 = vld [vmem:[%s2] sm:$0x1]
      %v190 = vperm.slane %v188, 0
      %v200 = vunpack.c.l.b16 %v175
      %v201 = vunpack.c.l.b16 %v176
      %v202 = vunpack.c.l.b16 %v177
      %v203 = vunpack.c.l.b16 %v178
      %v204 = vunpack.c.l.b16 %v179
      %v205 = vunpack.c.l.b16 %v180
      %v206 = vunpack.c.l.b16 %v181
      %v207 = vunpack.c.l.b16 %v182
      %v208 = vpack.c.b16 %v201, %v200
      %v209 = vpack.c.b16 %v203, %v202
      %v210 = vpack.c.b16 %v205, %v204
      %v211 = vpack.c.b16 %v207, %v206
      %v217 = vunpack.c.l.b16 %v183
      %v218 = vunpack.c.l.b16 %v184
      %v219 = vunpack.c.l.b16 %v185
      %v220 = vunpack.c.l.b16 %v186
      %v221 = vunpack.c.l.b16 %v187
      %v222 = vpack.c.b16 %v218, %v217
      %v223 = vpack.c.b16 %v220, %v219
      %v224 = vpack.c.b16 %v221, %v221
      %vm227 = vcmask 293888
      %v229 = vsel %vm227, %v208, 0
      %v232 = vsel %vm227, %v209, 0
      %v235 = vsel %vm227, %v210, 0
      %v238 = vsel %vm227, %v211, 0
      %vm240 = vcmask 1041408
      %v242 = vsel %vm240, %v224, 0
      %244 = vmatpush.bf16.msra.mxu0 0
      %245 = vmatpush.bf16.msra.mxu0 0
      %246 = vmatpush.bf16.msra.mxu0 0
      %247 = vmatpush.bf16.msra.mxu0 0
      %248 = vmatpush.bf16.msra.mxu0 0
      %249 = vmatpush.bf16.msra.mxu0 %v242
      %250 = vmatpush.bf16.msra.mxu0 %v223
      %251 = vmatpush.bf16.msra.mxu0 %v222
      %252 = vmatmul.bf16.gmra.mxu0 %v229
      %v253 = vpop.f32.mrf.mxu0
      %v254 = vadd.f32 %v190, %v253
      %v255 = vpop.f32.mrf.mxu0
      %v256 = vadd.f32 %v190, %v255
      %257 = vmatmul.bf16.gmra.mxu0 %v232
      %v258 = vpop.f32.mrf.mxu0
      %v259 = vadd.f32 %v190, %v258
      %v260 = vpop.f32.mrf.mxu0
      %v261 = vadd.f32 %v190, %v260
      %262 = vmatmul.bf16.gmra.mxu0 %v235
      %v263 = vpop.f32.mrf.mxu0
      %v264 = vadd.f32 %v190, %v263
      %v265 = vpop.f32.mrf.mxu0
      %v266 = vadd.f32 %v190, %v265
      %267 = vmatmul.bf16.gmra.mxu0 %v238
      %v268 = vpop.f32.mrf.mxu0
      %v269 = vadd.f32 %v190, %v268
      %v270 = vpop.f32.mrf.mxu0
      %v271 = vadd.f32 %v190, %v270
      %272 = vdwg.mxu0
      %v273 = vmax.f32 %v254, 0.0
      %v274 = vmax.f32 %v256, 0.0
      %v275 = vmax.f32 %v259, 0.0
      %v276 = vmax.f32 %v261, 0.0
      %v277 = vmax.f32 %v264, 0.0
      %v278 = vmax.f32 %v266, 0.0
      %v279 = vmax.f32 %v269, 0.0
      %v280 = vmax.f32 %v271, 0.0
      %vm281 = vcmask 64512
      %282 = vst.msk [vmem:[%s172] sm:$0xff] %vm281, %v273
      %283 = vst.msk [vmem:[%s172 + $0x8] sm:$0xff] %vm281, %v274
      %284 = vst.msk [vmem:[%s172 + $0x10] sm:$0xff] %vm281, %v275
      %285 = vst.msk [vmem:[%s172 + $0x18] sm:$0xff] %vm281, %v276
      %286 = vst.msk [vmem:[%s172 + $0x20] sm:$0xff] %vm281, %v277
      %287 = vst.msk [vmem:[%s172 + $0x28] sm:$0xff] %vm281, %v278
      %288 = vst.msk [vmem:[%s172 + $0x30] sm:$0xff] %vm281, %v279
      %289 = vst.msk [vmem:[%s172 + $0x38] sm:$0xff] %vm281, %v280
      %s290 = smul.u32 8, %s14
      %p291 = scmp.lt.s32.totalorder %s290, 63
      %s292 = scalar_select %p291, %s290, 63
      %s293 = smul.addr %s292, 8
      %s294 = scalar_lea.vmem %s3, %s293
      // Predicated region
      $region33: #{conv_block_forward.1} parent=31 // pred_check
        %p295 = pneg %p100
      $region34: #{conv_block_forward.1} parent=31 // pred_check_branch
        %297 = sbr.rel (%p295) target = $region36
      $region35: #{conv_block_forward.1} parent=31 // pred_region
        %s298 = smul.u32 8, %s14
      $region36: #{conv_block_forward.1} parent=31 // pred_fallthru
        _
    $region32: #{conv_block_forward.1} parent=5 // pred_fallthru
      _
    %p299 = scmp.le.s32.totalorder 2, %s9
    // Predicated region
    $region37: #{conv_block_forward.1} parent=5 // pred_check
      %p300 = pneg %p299
    $region38: #{conv_block_forward.1} parent=5 // pred_check_branch
      %302 = sbr.rel (%p300) target = $region40
    $region39: #{conv_block_forward.1} parent=5 // pred_region
      %s303 = ssub.s32 %s9, 2
      // Predicated region
      $region41: #{conv_block_forward.1} parent=39 // pred_check
        %p304 = pneg %p106
      $region42: #{conv_block_forward.1} parent=39 // pred_check_branch
        %306 = sbr.rel (%p304) target = $region44
      $region43: #{conv_block_forward.1} parent=39 // pred_region
        %s307 = smul.u32 8, %s15
        %p308 = scmp.lt.s32.totalorder %s307, 63
        %s309 = scalar_select %p308, %s307, 63
        %s310 = smul.addr %s309, 8
        %s311 = scalar_lea.vmem %s3, %s310
      $region44: #{conv_block_forward.1} parent=39 // pred_fallthru
        _
    $region40: #{conv_block_forward.1} parent=5 // pred_fallthru
      _
  $region6: #{conv_block_forward.1} parent=0 // loop_footer
    %s13 = sadd.s32 1, %s9
  $region7: #{conv_block_forward.1} parent=0 // loop_footer_branch
    %8 = sbr.rel target = $region3
  $region8: #{conv_block_forward.1} parent=0 // loop_exit
    _

</llo_original>
